<compile_context>
chip_gen: v6e
topology: v6e:2x2x1
jax: 0.10.0
libtpu: 0.0.40
codegen_flags: <defaults>
</compile_context>

<pallas_src>
import jax
import jax.numpy as jnp
from jax.experimental import pallas as pl
from jax.experimental.pallas import tpu as pltpu

FLATTEN_START_DIM = 1
DENSE_LAYER_SIZES = [32, 16]

_LANE = 128
_SUBLANE = 8


def _round_up(x, m):
    return ((x + m - 1) // m) * m


# ---------------------------------------------------------------------------
# Fused Pallas kernel:  out = ReLU(... ReLU(concat(xs) @ W1 + b1) ... @ Wn + bn)
# ---------------------------------------------------------------------------
def _make_fused_mlp_kernel(seg_widths, num_layers):
    """Build a kernel specialised (at trace time) to the input segmentation and the
    number of dense layers.  Ref order:
        xs[0..n_seg), W1_seg[0..n_seg), b1, (W_l, b_l) for layers 2..num_layers, out
    Every ref is a full-array VMEM block (gridless call)."""
    n_seg = len(seg_widths)

    def kernel(*refs):
        x_refs = refs[:n_seg]
        w1_refs = refs[n_seg:2 * n_seg]
        b1_ref = refs[2 * n_seg]
        rest = refs[2 * n_seg + 1:-1]
        o_ref = refs[-1]

        # Layer 1: concat folded into a split-K sum of partial products.
        acc = jnp.zeros((x_refs[0].shape[0], b1_ref.shape[1]), jnp.float32)
        for x_ref, w_ref, width in zip(x_refs, w1_refs, seg_widths):
            if width == 1:
                # Degenerate K=1 segment: cheaper as a VPU broadcast-multiply.
                acc = acc + x_ref[...] * w_ref[...]          # (Bp,1)*(1,H1p)
            else:
                acc = acc + jnp.dot(x_ref[...], w_ref[...],
                                    preferred_element_type=jnp.float32)
        h = jnp.maximum(acc + b1_ref[...], 0.0)

        # Remaining layers: stay on-chip; only the last result is stored.
        for l in range(1, num_layers):
            w_ref = rest[2 * (l - 1)]
            b_ref = rest[2 * (l - 1) + 1]
            h = jnp.maximum(
                jnp.dot(h, w_ref[...], preferred_element_type=jnp.float32)
                + b_ref[...],
                0.0,
            )

        o_ref[...] = h.astype(o_ref.dtype)   # full (Bp, 128k) lane-dense store

    return kernel


# ---------------------------------------------------------------------------
# Plain-JAX glue matching TorchAggregator.forward
# ---------------------------------------------------------------------------
def _ensure_enough_dim(t):
    while t.ndim <= FLATTEN_START_DIM:
        t = jnp.expand_dims(t, -1)
    return t


def _flatten(t):
    # nn.Flatten(start_dim=1)
    return t.reshape(t.shape[0], -1)


def init_params(concat_dim, dense_layer_sizes, key):
    """Deterministic LazyLinear-style params (kaiming-uniform-ish), true sizes."""
    params = []
    d_in = concat_dim
    for d_out in dense_layer_sizes:
        key, kw, kb = jax.random.split(key, 3)
        bound = 1.0 / jnp.sqrt(jnp.float32(d_in))
        w = jax.random.uniform(kw, (d_in, d_out), jnp.float32, -bound, bound)
        b = jax.random.uniform(kb, (d_out,), jnp.float32, -bound, bound)
        params.append((w, b))
        d_in = d_out
    return params


def torch_aggregator_forward(inputs, params):
    """inputs: list of arrays; params: list of (W, b) at true (unpadded) sizes."""
    tensors = [_ensure_enough_dim(t) for t in inputs]
    flattened = [_flatten(t) for t in tensors]

    if not params:
        # dense_layer_sizes empty/None: forward is just flatten + concat.
        return jnp.concatenate(flattened, axis=FLATTEN_START_DIM)

    seg_widths = [int(f.shape[1]) for f in flattened]
    B = int(flattened[0].shape[0])
    Bp = _round_up(max(B, _SUBLANE), _SUBLANE)

    # Zero-pad the batch (sublane) dim once; padded rows are sliced off at the end.
    xs = [jnp.pad(f.astype(jnp.float32), ((0, Bp - B), (0, 0))) for f in flattened]

    # Layer 1: split W1 row-wise per input segment; pad d_out to a lane multiple.
    w1, b1 = params[0]
    h1 = int(w1.shape[1])
    h1p = _round_up(h1, _LANE)
    offs = [0]
    for wdt in seg_widths:
        offs.append(offs[-1] + wdt)
    w1_segs = [
        jnp.pad(w1[offs[i]:offs[i + 1], :], ((0, 0), (0, h1p - h1)))
        for i in range(len(seg_widths))
    ]
    b1p = jnp.pad(b1, (0, h1p - h1)).reshape(1, h1p)

    # Remaining layers: pad both dims to lane multiples.  Padded columns carry
    # exactly-zero weights/bias, so ReLU(0)=0 padding never leaks into real outputs.
    rest = []
    d_in, d_in_p = h1, h1p
    for (w, b) in params[1:]:
        d_out = int(w.shape[1])
        d_out_p = _round_up(d_out, _LANE)
        rest.append(jnp.pad(w, ((0, d_in_p - d_in), (0, d_out_p - d_out))))
        rest.append(jnp.pad(b, (0, d_out_p - d_out)).reshape(1, d_out_p))
        d_in, d_in_p = d_out, d_out_p

    operands = xs + w1_segs + [b1p] + rest
    out_true, out_p = d_in, d_in_p

    # Advisory cost estimate so XLA schedules the custom call sensibly.
    flops = sum(2 * Bp * int(seg.shape[0]) * h1p for seg in w1_segs)
    for i in range(0, len(rest), 2):
        w = rest[i]
        flops += 2 * Bp * int(w.shape[0]) * int(w.shape[1])
    bytes_accessed = sum(int(o.size) * 4 for o in operands) + Bp * out_p * 4

    kernel = _make_fused_mlp_kernel(tuple(seg_widths), len(params))
    vmem_spec = pl.BlockSpec(memory_space=pltpu.MemorySpace.VMEM)

    out = pl.pallas_call(
        kernel,
        out_shape=jax.ShapeDtypeStruct((Bp, out_p), jnp.float32),
        in_specs=[vmem_spec] * len(operands),
        out_specs=vmem_spec,
        cost_estimate=pl.CostEstimate(
            flops=flops, transcendentals=0, bytes_accessed=bytes_accessed),
    )(*operands)

    # Dropout in eval mode is the identity; use_batch_norm=False by default.
    return out[:B, :out_true]


# ---------------------------------------------------------------------------
if __name__ == "__main__":
    key = jax.random.PRNGKey(0)
    k1, k2, k3, kp = jax.random.split(key, 4)

    # A heterogeneous list of inputs, as TorchAggregator.forward expects.
    x_img = jax.random.normal(k1, (2, 4, 16, 16), jnp.float32)   # NCHW feature map
    x_vec = jax.random.normal(k2, (2, 8), jnp.float32)           # dense features
    x_scalar = jax.random.normal(k3, (2,), jnp.float32)          # rank-1 -> unsqueezed

    concat_dim = 4 * 16 * 16 + 8 + 1                             # 1033
    params = init_params(concat_dim, DENSE_LAYER_SIZES, kp)

    out = torch_aggregator_forward([x_img, x_vec, x_scalar], params)
    out = jax.block_until_ready(out)

    assert out.shape == (2, DENSE_LAYER_SIZES[-1]), out.shape
    assert bool(jnp.all(out >= 0.0))  # ReLU output is non-negative

    # Cross-check against a pure-JAX reference of the same forward pass.
    ref = jnp.concatenate(
        [x_img.reshape(2, -1), x_vec, x_scalar.reshape(2, 1)], axis=1
    )
    for (w, b) in params:
        ref = jnp.maximum(ref @ w + b, 0.0)
    assert jnp.allclose(out, ref, atol=1e-4, rtol=1e-4), float(
        jnp.max(jnp.abs(out - ref)))

    print("KERNEL_OK")
</pallas_src>

<mosaic_0001>
module attributes {stable_mosaic.version = 11 : i64} {
  func.func @kernel(%arg0: memref<8x1024xf32, #tpu.memory_space<vmem>>, %arg1: memref<8x8xf32, #tpu.memory_space<vmem>>, %arg2: memref<8x1xf32, #tpu.memory_space<vmem>>, %arg3: memref<1024x128xf32, #tpu.memory_space<vmem>>, %arg4: memref<8x128xf32, #tpu.memory_space<vmem>>, %arg5: memref<1x128xf32, #tpu.memory_space<vmem>>, %arg6: memref<1x128xf32, #tpu.memory_space<vmem>>, %arg7: memref<128x128xf32, #tpu.memory_space<vmem>>, %arg8: memref<1x128xf32, #tpu.memory_space<vmem>>, %arg9: memref<8x128xf32, #tpu.memory_space<vmem>>) attributes {dimension_semantics = [], scalar_prefetch = 0 : i64, scratch_operands = 0 : i64, tpu.core_type = #tpu.core_type<tc>} {
    %cst = arith.constant 0.000000e+00 : f32
    %0 = vector.broadcast %cst : f32 to vector<8x128xf32>
    %c0 = arith.constant 0 : index
    %c0_0 = arith.constant 0 : index
    %1 = vector.load %arg0[%c0, %c0_0] : memref<8x1024xf32, #tpu.memory_space<vmem>>, vector<8x1024xf32>
    %c0_1 = arith.constant 0 : index
    %c0_2 = arith.constant 0 : index
    %2 = vector.load %arg3[%c0_1, %c0_2] : memref<1024x128xf32, #tpu.memory_space<vmem>>, vector<1024x128xf32>
    %cst_3 = arith.constant dense<0.000000e+00> : vector<8x128xf32>
    %3 = tpu.matmul %1, %2, %cst_3 {dimension_numbers = #tpu.dot_dimension_numbers<[1], [0], [0], [1], [0, 0, 1, 1], [], []>} : vector<8x1024xf32>, vector<1024x128xf32>, vector<8x128xf32> -> vector<8x128xf32>
    %4 = arith.addf %0, %3 : vector<8x128xf32>
    %c0_4 = arith.constant 0 : index
    %c0_5 = arith.constant 0 : index
    %5 = vector.load %arg1[%c0_4, %c0_5] : memref<8x8xf32, #tpu.memory_space<vmem>>, vector<8x8xf32>
    %c0_6 = arith.constant 0 : index
    %c0_7 = arith.constant 0 : index
    %6 = vector.load %arg4[%c0_6, %c0_7] : memref<8x128xf32, #tpu.memory_space<vmem>>, vector<8x128xf32>
    %cst_8 = arith.constant dense<0.000000e+00> : vector<8x128xf32>
    %7 = tpu.matmul %5, %6, %cst_8 {dimension_numbers = #tpu.dot_dimension_numbers<[1], [0], [0], [1], [0, 0, 1, 1], [], []>} : vector<8x8xf32>, vector<8x128xf32>, vector<8x128xf32> -> vector<8x128xf32>
    %8 = arith.addf %4, %7 : vector<8x128xf32>
    %c0_9 = arith.constant 0 : index
    %c0_10 = arith.constant 0 : index
    %9 = vector.load %arg2[%c0_9, %c0_10] : memref<8x1xf32, #tpu.memory_space<vmem>>, vector<8x1xf32>
    %c0_11 = arith.constant 0 : index
    %c0_12 = arith.constant 0 : index
    %10 = vector.load %arg5[%c0_11, %c0_12] : memref<1x128xf32, #tpu.memory_space<vmem>>, vector<1x128xf32>
    %11 = vector.broadcast %9 : vector<8x1xf32> to vector<8x128xf32>
    %12 = vector.broadcast %10 : vector<1x128xf32> to vector<8x128xf32>
    %13 = arith.mulf %11, %12 : vector<8x128xf32>
    %14 = arith.addf %8, %13 : vector<8x128xf32>
    %c0_13 = arith.constant 0 : index
    %c0_14 = arith.constant 0 : index
    %15 = vector.load %arg6[%c0_13, %c0_14] : memref<1x128xf32, #tpu.memory_space<vmem>>, vector<1x128xf32>
    %16 = vector.broadcast %15 : vector<1x128xf32> to vector<8x128xf32>
    %17 = arith.addf %14, %16 : vector<8x128xf32>
    %cst_15 = arith.constant 0.000000e+00 : f32
    %18 = vector.broadcast %cst_15 : f32 to vector<8x128xf32>
    %19 = arith.maximumf %17, %18 : vector<8x128xf32>
    %c0_16 = arith.constant 0 : index
    %c0_17 = arith.constant 0 : index
    %20 = vector.load %arg7[%c0_16, %c0_17] : memref<128x128xf32, #tpu.memory_space<vmem>>, vector<128x128xf32>
    %cst_18 = arith.constant dense<0.000000e+00> : vector<8x128xf32>
    %21 = tpu.matmul %19, %20, %cst_18 {dimension_numbers = #tpu.dot_dimension_numbers<[1], [0], [0], [1], [0, 0, 1, 1], [], []>} : vector<8x128xf32>, vector<128x128xf32>, vector<8x128xf32> -> vector<8x128xf32>
    %c0_19 = arith.constant 0 : index
    %c0_20 = arith.constant 0 : index
    %22 = vector.load %arg8[%c0_19, %c0_20] : memref<1x128xf32, #tpu.memory_space<vmem>>, vector<1x128xf32>
    %23 = vector.broadcast %22 : vector<1x128xf32> to vector<8x128xf32>
    %24 = arith.addf %21, %23 : vector<8x128xf32>
    %cst_21 = arith.constant 0.000000e+00 : f32
    %25 = vector.broadcast %cst_21 : f32 to vector<8x128xf32>
    %26 = arith.maximumf %24, %25 : vector<8x128xf32>
    %c0_22 = arith.constant 0 : index
    %c0_23 = arith.constant 0 : index
    %27 = vector.load %arg9[%c0_22, %c0_23] : memref<8x128xf32, #tpu.memory_space<vmem>>, vector<8x128xf32>
    tpu.vector_store %arg9[%c0_22, %c0_23], %26 {strides = array<i32>} : memref<8x128xf32, #tpu.memory_space<vmem>>, vector<8x128xf32>,
    return
  }
}

</mosaic_0001>

<llo_original>
// kernel: tpu_custom_call.1
$region0: #{tpu_custom_call.1}
  #allocation0 [shape = 'u32[]', space=smem, size = 0x4, offset = 0x4, fixed_abs, tag = 'smem constant byte address 0x4 - core index']
  #allocation1 [shape = 'u32[144,128]{1,0:T(1,128)}', space=vmem, size = 0x12000, scoped, tag = 'internal scratch']
  %s0 = inlined_call_operand.hbm [shape: f32[8,1024], index: 0, kind: input, shape index: {}]
  %s1 = inlined_call_operand.vmem [shape: f32[8,8], index: 1, kind: input, shape index: {}]
  %s2 = inlined_call_operand.vmem [shape: f32[8,1], index: 2, kind: input, shape index: {}]
  %s3 = inlined_call_operand.hbm [shape: f32[1024,128], index: 3, kind: input, shape index: {}]
  %s4 = inlined_call_operand.vmem [shape: f32[8,128], index: 4, kind: input, shape index: {}]
  %s5 = inlined_call_operand.vmem [shape: f32[1,128], index: 5, kind: input, shape index: {}]
  %s6 = inlined_call_operand.vmem [shape: f32[1,128], index: 6, kind: input, shape index: {}]
  %s7 = inlined_call_operand.hbm [shape: f32[128,128], index: 7, kind: input, shape index: {}]
  %s8 = inlined_call_operand.vmem [shape: f32[1,128], index: 8, kind: input, shape index: {}]
  %s9 = inlined_call_operand.hbm [shape: f32[8,128], index: 9, kind: output, shape index: {}]
  %s10 = sld [smem:[#allocation0]]
  $region58: #{tpu_custom_call.1} parent=0
    _
  %s12 = ssub.s32 1, %s10
  %s13 = scalar_select 0, %s12, %s10
  $region1: #{tpu_custom_call.1} parent=0
    #allocation2 [shape = 'u8[32768]{0}', space=vmem, size = 0x8000, scoped, tag = 'input window, operand 0, single buffered']
    #allocation3 [shape = 's32[1]{0}', space=sflag, size = 0x4, scoped, tag = 'scoped memory for tpu_custom_call.1']
    #allocation4 [shape = 's32[1]{0}', space=sflag, size = 0x4, scoped, tag = 'scoped memory for tpu_custom_call.1']
    #allocation5 [shape = 'u8[524288]{0}', space=vmem, size = 0x80000, scoped, tag = 'input window, operand 3, single buffered']
    #allocation6 [shape = 's32[1]{0}', space=sflag, size = 0x4, scoped, tag = 'scoped memory for tpu_custom_call.1']
    #allocation7 [shape = 'u8[65536]{0}', space=vmem, size = 0x10000, scoped, tag = 'input window, operand 7, single buffered']
    #allocation8 [shape = 'u8[4096]{0}', space=vmem, size = 0x1000, scoped, tag = 'output window, operand 0, single buffered']
    %14 = vsyncpa [#allocation3], 0
    %15 = vsyncpa [#allocation6], 0
    %16 = vsyncpa [#allocation4], 0
    // Predicated region
    $region2: #{tpu_custom_call.1} parent=1 // pred_check
      _
    $region3: #{tpu_custom_call.1} parent=1 // pred_check_branch
      %18 = sbr.rel (0) target = $region5
    $region4: #{tpu_custom_call.1} parent=1 // pred_region
      %s20 = ssub.s32 1024, 1024
      %21 = vsyncadd [#allocation3], %s20
      %s23 = sshll.u32 [#allocation2], 4
      %s24 = int_to_ptr.vmem [resolvable:$true] %s23
      %26 = dma.hbm_to_vmem [thread:$0]  %s0, 1024, %s24, [#allocation3]
    $region5: #{tpu_custom_call.1} parent=1 // pred_fallthru
      _
    // Predicated region
    $region6: #{tpu_custom_call.1} parent=1 // pred_check
      _
    $region7: #{tpu_custom_call.1} parent=1 // pred_check_branch
      %28 = sbr.rel (0) target = $region9
    $region8: #{tpu_custom_call.1} parent=1 // pred_region
      _
    $region9: #{tpu_custom_call.1} parent=1 // pred_fallthru
      _
    // Predicated region
    $region10: #{tpu_custom_call.1} parent=1 // pred_check
      _
    $region11: #{tpu_custom_call.1} parent=1 // pred_check_branch
      %30 = sbr.rel (0) target = $region13
    $region12: #{tpu_custom_call.1} parent=1 // pred_region
      _
    $region13: #{tpu_custom_call.1} parent=1 // pred_fallthru
      _
    // Predicated region
    $region14: #{tpu_custom_call.1} parent=1 // pred_check
      _
    $region15: #{tpu_custom_call.1} parent=1 // pred_check_branch
      %32 = sbr.rel (0) target = $region17
    $region16: #{tpu_custom_call.1} parent=1 // pred_region
      %s34 = ssub.s32 16384, 16384
      %35 = vsyncadd [#allocation6], %s34
      %s36 = sshll.u32 [#allocation5], 4
      %s37 = int_to_ptr.vmem [resolvable:$true] %s36
      %42 = dma.hbm_to_vmem [thread:$0]  %s3, 16384, %s37, [#allocation6], 128, 128, 8
    $region17: #{tpu_custom_call.1} parent=1 // pred_fallthru
      _
    // Predicated region
    $region18: #{tpu_custom_call.1} parent=1 // pred_check
      _
    $region19: #{tpu_custom_call.1} parent=1 // pred_check_branch
      %44 = sbr.rel (0) target = $region21
    $region20: #{tpu_custom_call.1} parent=1 // pred_region
      _
    $region21: #{tpu_custom_call.1} parent=1 // pred_fallthru
      _
    // Predicated region
    $region22: #{tpu_custom_call.1} parent=1 // pred_check
      _
    $region23: #{tpu_custom_call.1} parent=1 // pred_check_branch
      %46 = sbr.rel (0) target = $region25
    $region24: #{tpu_custom_call.1} parent=1 // pred_region
      _
    $region25: #{tpu_custom_call.1} parent=1 // pred_fallthru
      _
    // Predicated region
    $region26: #{tpu_custom_call.1} parent=1 // pred_check
      _
    $region27: #{tpu_custom_call.1} parent=1 // pred_check_branch
      %48 = sbr.rel (0) target = $region29
    $region28: #{tpu_custom_call.1} parent=1 // pred_region
      _
    $region29: #{tpu_custom_call.1} parent=1 // pred_fallthru
      _
    // Predicated region
    $region30: #{tpu_custom_call.1} parent=1 // pred_check
      _
    $region31: #{tpu_custom_call.1} parent=1 // pred_check_branch
      %50 = sbr.rel (0) target = $region33
    $region32: #{tpu_custom_call.1} parent=1 // pred_region
      %s52 = ssub.s32 2048, 2048
      %53 = vsyncadd [#allocation6], %s52
      %s54 = sshll.u32 [#allocation7], 4
      %s55 = int_to_ptr.vmem [resolvable:$true] %s54
      %60 = dma.hbm_to_vmem [thread:$0]  %s7, 2048, %s55, [#allocation6], 128, 128, 8
    $region33: #{tpu_custom_call.1} parent=1 // pred_fallthru
      _
    // Predicated region
    $region34: #{tpu_custom_call.1} parent=1 // pred_check
      _
    $region35: #{tpu_custom_call.1} parent=1 // pred_check_branch
      %62 = sbr.rel (0) target = $region37
    $region36: #{tpu_custom_call.1} parent=1 // pred_region
      _
    $region37: #{tpu_custom_call.1} parent=1 // pred_fallthru
      _
    // Predicated region
    $region38: #{tpu_custom_call.1} parent=1 // pred_check
      _
    $region39: #{tpu_custom_call.1} parent=1 // pred_check_branch
      %64 = sbr.rel (0) target = $region41
    $region40: #{tpu_custom_call.1} parent=1 // pred_region
      %65 = dma.done [#allocation3], 1024
    $region41: #{tpu_custom_call.1} parent=1 // pred_fallthru
      _
    // Predicated region
    $region42: #{tpu_custom_call.1} parent=1 // pred_check
      _
    $region43: #{tpu_custom_call.1} parent=1 // pred_check_branch
      %67 = sbr.rel (0) target = $region45
    $region44: #{tpu_custom_call.1} parent=1 // pred_region
      %68 = dma.done [#allocation6], 16384
    $region45: #{tpu_custom_call.1} parent=1 // pred_fallthru
      _
    // Predicated region
    $region46: #{tpu_custom_call.1} parent=1 // pred_check
      _
    $region47: #{tpu_custom_call.1} parent=1 // pred_check_branch
      %70 = sbr.rel (0) target = $region49
    $region48: #{tpu_custom_call.1} parent=1 // pred_region
      %71 = dma.done [#allocation6], 2048
    $region49: #{tpu_custom_call.1} parent=1 // pred_fallthru
      _
    %v72 = vld [vmem:[#allocation2] sm:$0xff]
    %v73 = vld [vmem:[#allocation2 + $0x8] sm:$0xff]
    %v74 = vld [vmem:[#allocation2 + $0x10] sm:$0xff]
    %v75 = vld [vmem:[#allocation2 + $0x18] sm:$0xff]
    %v76 = vld [vmem:[#allocation2 + $0x20] sm:$0xff]
    %v77 = vld [vmem:[#allocation2 + $0x28] sm:$0xff]
    %v78 = vld [vmem:[#allocation2 + $0x30] sm:$0xff]
    %v79 = vld [vmem:[#allocation2 + $0x38] sm:$0xff]
    %v80 = vld [vmem:[#allocation5] sm:$0xff]
    %v81 = vld [vmem:[#allocation5 + $0x8] sm:$0xff]
    %v82 = vld [vmem:[#allocation5 + $0x10] sm:$0xff]
    %v83 = vld [vmem:[#allocation5 + $0x18] sm:$0xff]
    %v84 = vld [vmem:[#allocation5 + $0x20] sm:$0xff]
    %v85 = vld [vmem:[#allocation5 + $0x28] sm:$0xff]
    %v86 = vld [vmem:[#allocation5 + $0x30] sm:$0xff]
    %v87 = vld [vmem:[#allocation5 + $0x38] sm:$0xff]
    %v88 = vld [vmem:[#allocation5 + $0x40] sm:$0xff]
    %v89 = vld [vmem:[#allocation5 + $0x48] sm:$0xff]
    %v90 = vld [vmem:[#allocation5 + $0x50] sm:$0xff]
    %v91 = vld [vmem:[#allocation5 + $0x58] sm:$0xff]
    %v92 = vld [vmem:[#allocation5 + $0x60] sm:$0xff]
    %v93 = vld [vmem:[#allocation5 + $0x68] sm:$0xff]
    %v94 = vld [vmem:[#allocation5 + $0x70] sm:$0xff]
    %v95 = vld [vmem:[#allocation5 + $0x78] sm:$0xff]
    %v96 = vld [vmem:[#allocation5 + $0x80] sm:$0xff]
    %v97 = vld [vmem:[#allocation5 + $0x88] sm:$0xff]
    %v98 = vld [vmem:[#allocation5 + $0x90] sm:$0xff]
    %v99 = vld [vmem:[#allocation5 + $0x98] sm:$0xff]
    %v100 = vld [vmem:[#allocation5 + $0xa0] sm:$0xff]
    %v101 = vld [vmem:[#allocation5 + $0xa8] sm:$0xff]
    %v102 = vld [vmem:[#allocation5 + $0xb0] sm:$0xff]
    %v103 = vld [vmem:[#allocation5 + $0xb8] sm:$0xff]
    %v104 = vld [vmem:[#allocation5 + $0xc0] sm:$0xff]
    %v105 = vld [vmem:[#allocation5 + $0xc8] sm:$0xff]
    %v106 = vld [vmem:[#allocation5 + $0xd0] sm:$0xff]
    %v107 = vld [vmem:[#allocation5 + $0xd8] sm:$0xff]
    %v108 = vld [vmem:[#allocation5 + $0xe0] sm:$0xff]
    %v109 = vld [vmem:[#allocation5 + $0xe8] sm:$0xff]
    %v110 = vld [vmem:[#allocation5 + $0xf0] sm:$0xff]
    %v111 = vld [vmem:[#allocation5 + $0xf8] sm:$0xff]
    %v112 = vld [vmem:[#allocation5 + $0x100] sm:$0xff]
    %v113 = vld [vmem:[#allocation5 + $0x108] sm:$0xff]
    %v114 = vld [vmem:[#allocation5 + $0x110] sm:$0xff]
    %v115 = vld [vmem:[#allocation5 + $0x118] sm:$0xff]
    %v116 = vld [vmem:[#allocation5 + $0x120] sm:$0xff]
    %v117 = vld [vmem:[#allocation5 + $0x128] sm:$0xff]
    %v118 = vld [vmem:[#allocation5 + $0x130] sm:$0xff]
    %v119 = vld [vmem:[#allocation5 + $0x138] sm:$0xff]
    %v120 = vld [vmem:[#allocation5 + $0x140] sm:$0xff]
    %v121 = vld [vmem:[#allocation5 + $0x148] sm:$0xff]
    %v122 = vld [vmem:[#allocation5 + $0x150] sm:$0xff]
    %v123 = vld [vmem:[#allocation5 + $0x158] sm:$0xff]
    %v124 = vld [vmem:[#allocation5 + $0x160] sm:$0xff]
    %v125 = vld [vmem:[#allocation5 + $0x168] sm:$0xff]
    %v126 = vld [vmem:[#allocation5 + $0x170] sm:$0xff]
    %v127 = vld [vmem:[#allocation5 + $0x178] sm:$0xff]
    %v128 = vld [vmem:[#allocation5 + $0x180] sm:$0xff]
    %v129 = vld [vmem:[#allocation5 + $0x188] sm:$0xff]
    %v130 = vld [vmem:[#allocation5 + $0x190] sm:$0xff]
    %v131 = vld [vmem:[#allocation5 + $0x198] sm:$0xff]
    %v132 = vld [vmem:[#allocation5 + $0x1a0] sm:$0xff]
    %v133 = vld [vmem:[#allocation5 + $0x1a8] sm:$0xff]
    %v134 = vld [vmem:[#allocation5 + $0x1b0] sm:$0xff]
    %v135 = vld [vmem:[#allocation5 + $0x1b8] sm:$0xff]
    %v136 = vld [vmem:[#allocation5 + $0x1c0] sm:$0xff]
    %v137 = vld [vmem:[#allocation5 + $0x1c8] sm:$0xff]
    %v138 = vld [vmem:[#allocation5 + $0x1d0] sm:$0xff]
    %v139 = vld [vmem:[#allocation5 + $0x1d8] sm:$0xff]
    %v140 = vld [vmem:[#allocation5 + $0x1e0] sm:$0xff]
    %v141 = vld [vmem:[#allocation5 + $0x1e8] sm:$0xff]
    %v142 = vld [vmem:[#allocation5 + $0x1f0] sm:$0xff]
    %v143 = vld [vmem:[#allocation5 + $0x1f8] sm:$0xff]
    %v144 = vld [vmem:[#allocation5 + $0x200] sm:$0xff]
    %v145 = vld [vmem:[#allocation5 + $0x208] sm:$0xff]
    %v146 = vld [vmem:[#allocation5 + $0x210] sm:$0xff]
    %v147 = vld [vmem:[#allocation5 + $0x218] sm:$0xff]
    %v148 = vld [vmem:[#allocation5 + $0x220] sm:$0xff]
    %v149 = vld [vmem:[#allocation5 + $0x228] sm:$0xff]
    %v150 = vld [vmem:[#allocation5 + $0x230] sm:$0xff]
    %v151 = vld [vmem:[#allocation5 + $0x238] sm:$0xff]
    %v152 = vld [vmem:[#allocation5 + $0x240] sm:$0xff]
    %v153 = vld [vmem:[#allocation5 + $0x248] sm:$0xff]
    %v154 = vld [vmem:[#allocation5 + $0x250] sm:$0xff]
    %v155 = vld [vmem:[#allocation5 + $0x258] sm:$0xff]
    %v156 = vld [vmem:[#allocation5 + $0x260] sm:$0xff]
    %v157 = vld [vmem:[#allocation5 + $0x268] sm:$0xff]
    %v158 = vld [vmem:[#allocation5 + $0x270] sm:$0xff]
    %v159 = vld [vmem:[#allocation5 + $0x278] sm:$0xff]
    %v160 = vld [vmem:[#allocation5 + $0x280] sm:$0xff]
    %v161 = vld [vmem:[#allocation5 + $0x288] sm:$0xff]
    %v162 = vld [vmem:[#allocation5 + $0x290] sm:$0xff]
    %v163 = vld [vmem:[#allocation5 + $0x298] sm:$0xff]
    %v164 = vld [vmem:[#allocation5 + $0x2a0] sm:$0xff]
    %v165 = vld [vmem:[#allocation5 + $0x2a8] sm:$0xff]
    %v166 = vld [vmem:[#allocation5 + $0x2b0] sm:$0xff]
    %v167 = vld [vmem:[#allocation5 + $0x2b8] sm:$0xff]
    %v168 = vld [vmem:[#allocation5 + $0x2c0] sm:$0xff]
    %v169 = vld [vmem:[#allocation5 + $0x2c8] sm:$0xff]
    %v170 = vld [vmem:[#allocation5 + $0x2d0] sm:$0xff]
    %v171 = vld [vmem:[#allocation5 + $0x2d8] sm:$0xff]
    %v172 = vld [vmem:[#allocation5 + $0x2e0] sm:$0xff]
    %v173 = vld [vmem:[#allocation5 + $0x2e8] sm:$0xff]
    %v174 = vld [vmem:[#allocation5 + $0x2f0] sm:$0xff]
    %v175 = vld [vmem:[#allocation5 + $0x2f8] sm:$0xff]
    %v176 = vld [vmem:[#allocation5 + $0x300] sm:$0xff]
    %v177 = vld [vmem:[#allocation5 + $0x308] sm:$0xff]
    %v178 = vld [vmem:[#allocation5 + $0x310] sm:$0xff]
    %v179 = vld [vmem:[#allocation5 + $0x318] sm:$0xff]
    %v180 = vld [vmem:[#allocation5 + $0x320] sm:$0xff]
    %v181 = vld [vmem:[#allocation5 + $0x328] sm:$0xff]
    %v182 = vld [vmem:[#allocation5 + $0x330] sm:$0xff]
    %v183 = vld [vmem:[#allocation5 + $0x338] sm:$0xff]
    %v184 = vld [vmem:[#allocation5 + $0x340] sm:$0xff]
    %v185 = vld [vmem:[#allocation5 + $0x348] sm:$0xff]
    %v186 = vld [vmem:[#allocation5 + $0x350] sm:$0xff]
    %v187 = vld [vmem:[#allocation5 + $0x358] sm:$0xff]
    %v188 = vld [vmem:[#allocation5 + $0x360] sm:$0xff]
    %v189 = vld [vmem:[#allocation5 + $0x368] sm:$0xff]
    %v190 = vld [vmem:[#allocation5 + $0x370] sm:$0xff]
    %v191 = vld [vmem:[#allocation5 + $0x378] sm:$0xff]
    %v192 = vld [vmem:[#allocation5 + $0x380] sm:$0xff]
    %v193 = vld [vmem:[#allocation5 + $0x388] sm:$0xff]
    %v194 = vld [vmem:[#allocation5 + $0x390] sm:$0xff]
    %v195 = vld [vmem:[#allocation5 + $0x398] sm:$0xff]
    %v196 = vld [vmem:[#allocation5 + $0x3a0] sm:$0xff]
    %v197 = vld [vmem:[#allocation5 + $0x3a8] sm:$0xff]
    %v198 = vld [vmem:[#allocation5 + $0x3b0] sm:$0xff]
    %v199 = vld [vmem:[#allocation5 + $0x3b8] sm:$0xff]
    %v200 = vld [vmem:[#allocation5 + $0x3c0] sm:$0xff]
    %v201 = vld [vmem:[#allocation5 + $0x3c8] sm:$0xff]
    %v202 = vld [vmem:[#allocation5 + $0x3d0] sm:$0xff]
    %v203 = vld [vmem:[#allocation5 + $0x3d8] sm:$0xff]
    %v204 = vld [vmem:[#allocation5 + $0x3e0] sm:$0xff]
    %v205 = vld [vmem:[#allocation5 + $0x3e8] sm:$0xff]
    %v206 = vld [vmem:[#allocation5 + $0x3f0] sm:$0xff]
    %v207 = vld [vmem:[#allocation5 + $0x3f8] sm:$0xff]
    %v208 = vld [vmem:[%s1] sm:$0xff]
    %v209 = vld [vmem:[%s4] sm:$0xff]
    %vm210 = vcmask 64512
    %v212 = vsel %vm210, %v208, 0
    %214 = vmatprep.subr.mxu0 0.0
    %215 = vmatpush1.msra.mxu0 0.0
    %216 = vmatprep.subr.mxu0 0.0
    %217 = vmatpush1.msra.mxu0 0.0
    %218 = vmatprep.subr.mxu0 0.0
    %219 = vmatpush1.msra.mxu0 0.0
    %220 = vmatprep.subr.mxu0 0.0
    %221 = vmatpush1.msra.mxu0 0.0
    %222 = vmatprep.subr.mxu0 0.0
    %223 = vmatpush1.msra.mxu0 0.0
    %224 = vmatprep.subr.mxu0 0.0
    %225 = vmatpush1.msra.mxu0 0.0
    %226 = vmatprep.subr.mxu0 0.0
    %227 = vmatpush1.msra.mxu0 0.0
    %228 = vmatprep.subr.mxu0 0.0
    %229 = vmatpush1.msra.mxu0 0.0
    %230 = vmatprep.subr.mxu0 0.0
    %231 = vmatpush1.msra.mxu0 0.0
    %232 = vmatprep.subr.mxu0 0.0
    %233 = vmatpush1.msra.mxu0 0.0
    %234 = vmatprep.subr.mxu0 0.0
    %235 = vmatpush1.msra.mxu0 0.0
    %236 = vmatprep.subr.mxu0 0.0
    %237 = vmatpush1.msra.mxu0 0.0
    %238 = vmatprep.subr.mxu0 0.0
    %239 = vmatpush1.msra.mxu0 0.0
    %240 = vmatprep.subr.mxu0 0.0
    %241 = vmatpush1.msra.mxu0 0.0
    %242 = vmatprep.subr.mxu0 0.0
    %243 = vmatpush1.msra.mxu0 0.0
    %244 = vmatprep.subr.mxu0 0.0
    %245 = vmatpush1.msra.mxu0 %v209
    %246 = vmatprep.subr.mxu0 0.0
    %247 = vmatpush2.msra.mxu0 0.0
    %248 = vmatprep.subr.mxu0 0.0
    %249 = vmatpush2.msra.mxu0 0.0
    %250 = vmatprep.subr.mxu0 0.0
    %251 = vmatpush2.msra.mxu0 0.0
    %252 = vmatprep.subr.mxu0 0.0
    %253 = vmatpush2.msra.mxu0 0.0
    %254 = vmatprep.subr.mxu0 0.0
    %255 = vmatpush2.msra.mxu0 0.0
    %256 = vmatprep.subr.mxu0 0.0
    %257 = vmatpush2.msra.mxu0 0.0
    %258 = vmatprep.subr.mxu0 0.0
    %259 = vmatpush2.msra.mxu0 0.0
    %260 = vmatprep.subr.mxu0 0.0
    %261 = vmatpush2.msra.mxu0 0.0
    %262 = vmatprep.subr.mxu0 0.0
    %263 = vmatpush2.msra.mxu0 0.0
    %264 = vmatprep.subr.mxu0 0.0
    %265 = vmatpush2.msra.mxu0 0.0
    %266 = vmatprep.subr.mxu0 0.0
    %267 = vmatpush2.msra.mxu0 0.0
    %268 = vmatprep.subr.mxu0 0.0
    %269 = vmatpush2.msra.mxu0 0.0
    %270 = vmatprep.subr.mxu0 0.0
    %271 = vmatpush2.msra.mxu0 0.0
    %272 = vmatprep.subr.mxu0 0.0
    %273 = vmatpush2.msra.mxu0 0.0
    %274 = vmatprep.subr.mxu0 0.0
    %275 = vmatpush2.msra.mxu0 0.0
    %276 = vmatprep.subr.mxu0 0.0
    %277 = vmatpush2.msra.mxu0 0.0
    %278 = vmatprep.mubr.f32.mxu0 0.0
    %279 = vmatmul.mubr.f32.gmra.mxu0 %v212
    %v280 = vpop.f32.mrf.mxu0
    %v281 = vadd.f32 0.0, %v280
    %v282 = vpop.f32.mrf.mxu0
    %283 = vdwg.mxu0
    %284 = vmatprep.subr.mxu0 0.0
    %285 = vmatpush1.msra.mxu0 %v95
    %286 = vmatprep.subr.mxu0 0.0
    %287 = vmatpush1.msra.mxu0 %v94
    %288 = vmatprep.subr.mxu0 0.0
    %289 = vmatpush1.msra.mxu0 %v93
    %290 = vmatprep.subr.mxu0 0.0
    %291 = vmatpush1.msra.mxu0 %v92
    %292 = vmatprep.subr.mxu0 0.0
    %293 = vmatpush1.msra.mxu0 %v91
    %294 = vmatprep.subr.mxu0 0.0
    %295 = vmatpush1.msra.mxu0 %v90
    %296 = vmatprep.subr.mxu0 0.0
    %297 = vmatpush1.msra.mxu0 %v89
    %298 = vmatprep.subr.mxu0 0.0
    %299 = vmatpush1.msra.mxu0 %v88
    %300 = vmatprep.subr.mxu0 0.0
    %301 = vmatpush1.msra.mxu0 %v87
    %302 = vmatprep.subr.mxu0 0.0
    %303 = vmatpush1.msra.mxu0 %v86
    %304 = vmatprep.subr.mxu0 0.0
    %305 = vmatpush1.msra.mxu0 %v85
    %306 = vmatprep.subr.mxu0 0.0
    %307 = vmatpush1.msra.mxu0 %v84
    %308 = vmatprep.subr.mxu0 0.0
    %309 = vmatpush1.msra.mxu0 %v83
    %310 = vmatprep.subr.mxu0 0.0
    %311 = vmatpush1.msra.mxu0 %v82
    %312 = vmatprep.subr.mxu0 0.0
    %313 = vmatpush1.msra.mxu0 %v81
    %314 = vmatprep.subr.mxu0 0.0
    %315 = vmatpush1.msra.mxu0 %v80
    %316 = vmatprep.subr.mxu0 0.0
    %317 = vmatpush2.msra.mxu0 %v111
    %318 = vmatprep.subr.mxu0 0.0
    %319 = vmatpush2.msra.mxu0 %v110
    %320 = vmatprep.subr.mxu0 0.0
    %321 = vmatpush2.msra.mxu0 %v109
    %322 = vmatprep.subr.mxu0 0.0
    %323 = vmatpush2.msra.mxu0 %v108
    %324 = vmatprep.subr.mxu0 0.0
    %325 = vmatpush2.msra.mxu0 %v107
    %326 = vmatprep.subr.mxu0 0.0
    %327 = vmatpush2.msra.mxu0 %v106
    %328 = vmatprep.subr.mxu0 0.0
    %329 = vmatpush2.msra.mxu0 %v105
    %330 = vmatprep.subr.mxu0 0.0
    %331 = vmatpush2.msra.mxu0 %v104
    %332 = vmatprep.subr.mxu0 0.0
    %333 = vmatpush2.msra.mxu0 %v103
    %334 = vmatprep.subr.mxu0 0.0
    %335 = vmatpush2.msra.mxu0 %v102
    %336 = vmatprep.subr.mxu0 0.0
    %337 = vmatpush2.msra.mxu0 %v101
    %338 = vmatprep.subr.mxu0 0.0
    %339 = vmatpush2.msra.mxu0 %v100
    %340 = vmatprep.subr.mxu0 0.0
    %341 = vmatpush2.msra.mxu0 %v99
    %342 = vmatprep.subr.mxu0 0.0
    %343 = vmatpush2.msra.mxu0 %v98
    %344 = vmatprep.subr.mxu0 0.0
    %345 = vmatpush2.msra.mxu0 %v97
    %346 = vmatprep.subr.mxu0 0.0
    %347 = vmatpush2.msra.mxu0 %v96
    %348 = vmatprep.mubr.f32.mxu0 %v73
    %349 = vmatmul.mubr.f32.gmra.mxu0 %v72
    %v350 = vpop.f32.mrf.mxu0
    %v351 = vadd.f32 %v281, %v350
    %v352 = vpop.f32.mrf.mxu0
    %353 = vdwg.mxu0
    %354 = vmatprep.subr.mxu0 0.0
    %355 = vmatpush1.msra.mxu0 %v127
    %356 = vmatprep.subr.mxu0 0.0
    %357 = vmatpush1.msra.mxu0 %v126
    %358 = vmatprep.subr.mxu0 0.0
    %359 = vmatpush1.msra.mxu0 %v125
    %360 = vmatprep.subr.mxu0 0.0
    %361 = vmatpush1.msra.mxu0 %v124
    %362 = vmatprep.subr.mxu0 0.0
    %363 = vmatpush1.msra.mxu0 %v123
    %364 = vmatprep.subr.mxu0 0.0
    %365 = vmatpush1.msra.mxu0 %v122
    %366 = vmatprep.subr.mxu0 0.0
    %367 = vmatpush1.msra.mxu0 %v121
    %368 = vmatprep.subr.mxu0 0.0
    %369 = vmatpush1.msra.mxu0 %v120
    %370 = vmatprep.subr.mxu0 0.0
    %371 = vmatpush1.msra.mxu0 %v119
    %372 = vmatprep.subr.mxu0 0.0
    %373 = vmatpush1.msra.mxu0 %v118
    %374 = vmatprep.subr.mxu0 0.0
    %375 = vmatpush1.msra.mxu0 %v117
    %376 = vmatprep.subr.mxu0 0.0
    %377 = vmatpush1.msra.mxu0 %v116
    %378 = vmatprep.subr.mxu0 0.0
    %379 = vmatpush1.msra.mxu0 %v115
    %380 = vmatprep.subr.mxu0 0.0
    %381 = vmatpush1.msra.mxu0 %v114
    %382 = vmatprep.subr.mxu0 0.0
    %383 = vmatpush1.msra.mxu0 %v113
    %384 = vmatprep.subr.mxu0 0.0
    %385 = vmatpush1.msra.mxu0 %v112
    %386 = vmatprep.subr.mxu0 0.0
    %387 = vmatpush2.msra.mxu0 %v143
    %388 = vmatprep.subr.mxu0 0.0
    %389 = vmatpush2.msra.mxu0 %v142
    %390 = vmatprep.subr.mxu0 0.0
    %391 = vmatpush2.msra.mxu0 %v141
    %392 = vmatprep.subr.mxu0 0.0
    %393 = vmatpush2.msra.mxu0 %v140
    %394 = vmatprep.subr.mxu0 0.0
    %395 = vmatpush2.msra.mxu0 %v139
    %396 = vmatprep.subr.mxu0 0.0
    %397 = vmatpush2.msra.mxu0 %v138
    %398 = vmatprep.subr.mxu0 0.0
    %399 = vmatpush2.msra.mxu0 %v137
    %400 = vmatprep.subr.mxu0 0.0
    %401 = vmatpush2.msra.mxu0 %v136
    %402 = vmatprep.subr.mxu0 0.0
    %403 = vmatpush2.msra.mxu0 %v135
    %404 = vmatprep.subr.mxu0 0.0
    %405 = vmatpush2.msra.mxu0 %v134
    %406 = vmatprep.subr.mxu0 0.0
    %407 = vmatpush2.msra.mxu0 %v133
    %408 = vmatprep.subr.mxu0 0.0
    %409 = vmatpush2.msra.mxu0 %v132
    %410 = vmatprep.subr.mxu0 0.0
    %411 = vmatpush2.msra.mxu0 %v131
    %412 = vmatprep.subr.mxu0 0.0
    %413 = vmatpush2.msra.mxu0 %v130
    %414 = vmatprep.subr.mxu0 0.0
    %415 = vmatpush2.msra.mxu0 %v129
    %416 = vmatprep.subr.mxu0 0.0
    %417 = vmatpush2.msra.mxu0 %v128
    %418 = vmatprep.mubr.f32.mxu0 %v75
    %419 = vmatmul.mubr.f32.gmra.mxu0 %v74
    %v420 = vpop.f32.mrf.mxu0
    %v421 = vadd.f32 %v351, %v420
    %v422 = vpop.f32.mrf.mxu0
    %423 = vdwg.mxu0
    %424 = vmatprep.subr.mxu0 0.0
    %425 = vmatpush1.msra.mxu0 %v159
    %426 = vmatprep.subr.mxu0 0.0
    %427 = vmatpush1.msra.mxu0 %v158
    %428 = vmatprep.subr.mxu0 0.0
    %429 = vmatpush1.msra.mxu0 %v157
    %430 = vmatprep.subr.mxu0 0.0
    %431 = vmatpush1.msra.mxu0 %v156
    %432 = vmatprep.subr.mxu0 0.0
    %433 = vmatpush1.msra.mxu0 %v155
    %434 = vmatprep.subr.mxu0 0.0
    %435 = vmatpush1.msra.mxu0 %v154
    %436 = vmatprep.subr.mxu0 0.0
    %437 = vmatpush1.msra.mxu0 %v153
    %438 = vmatprep.subr.mxu0 0.0
    %439 = vmatpush1.msra.mxu0 %v152
    %440 = vmatprep.subr.mxu0 0.0
    %441 = vmatpush1.msra.mxu0 %v151
    %442 = vmatprep.subr.mxu0 0.0
    %443 = vmatpush1.msra.mxu0 %v150
    %444 = vmatprep.subr.mxu0 0.0
    %445 = vmatpush1.msra.mxu0 %v149
    %446 = vmatprep.subr.mxu0 0.0
    %447 = vmatpush1.msra.mxu0 %v148
    %448 = vmatprep.subr.mxu0 0.0
    %449 = vmatpush1.msra.mxu0 %v147
    %450 = vmatprep.subr.mxu0 0.0
    %451 = vmatpush1.msra.mxu0 %v146
    %452 = vmatprep.subr.mxu0 0.0
    %453 = vmatpush1.msra.mxu0 %v145
    %454 = vmatprep.subr.mxu0 0.0
    %455 = vmatpush1.msra.mxu0 %v144
    %456 = vmatprep.subr.mxu0 0.0
    %457 = vmatpush2.msra.mxu0 %v175
    %458 = vmatprep.subr.mxu0 0.0
    %459 = vmatpush2.msra.mxu0 %v174
    %460 = vmatprep.subr.mxu0 0.0
    %461 = vmatpush2.msra.mxu0 %v173
    %462 = vmatprep.subr.mxu0 0.0
    %463 = vmatpush2.msra.mxu0 %v172
    %464 = vmatprep.subr.mxu0 0.0
    %465 = vmatpush2.msra.mxu0 %v171
    %466 = vmatprep.subr.mxu0 0.0
    %467 = vmatpush2.msra.mxu0 %v170
    %468 = vmatprep.subr.mxu0 0.0
    %469 = vmatpush2.msra.mxu0 %v169
    %470 = vmatprep.subr.mxu0 0.0
    %471 = vmatpush2.msra.mxu0 %v168
    %472 = vmatprep.subr.mxu0 0.0
    %473 = vmatpush2.msra.mxu0 %v167
    %474 = vmatprep.subr.mxu0 0.0
    %475 = vmatpush2.msra.mxu0 %v166
    %476 = vmatprep.subr.mxu0 0.0
    %477 = vmatpush2.msra.mxu0 %v165
    %478 = vmatprep.subr.mxu0 0.0
    %479 = vmatpush2.msra.mxu0 %v164
    %480 = vmatprep.subr.mxu0 0.0
    %481 = vmatpush2.msra.mxu0 %v163
    %482 = vmatprep.subr.mxu0 0.0
    %483 = vmatpush2.msra.mxu0 %v162
    %484 = vmatprep.subr.mxu0 0.0
    %485 = vmatpush2.msra.mxu0 %v161
    %486 = vmatprep.subr.mxu0 0.0
    %487 = vmatpush2.msra.mxu0 %v160
    %488 = vmatprep.mubr.f32.mxu0 %v77
    %489 = vmatmul.mubr.f32.gmra.mxu0 %v76
    %v490 = vpop.f32.mrf.mxu0
    %v491 = vadd.f32 %v421, %v490
    %v492 = vpop.f32.mrf.mxu0
    %493 = vdwg.mxu0
    %494 = vmatprep.subr.mxu0 0.0
    %495 = vmatpush1.msra.mxu0 %v191
    %496 = vmatprep.subr.mxu0 0.0
    %497 = vmatpush1.msra.mxu0 %v190
    %498 = vmatprep.subr.mxu0 0.0
    %499 = vmatpush1.msra.mxu0 %v189
    %500 = vmatprep.subr.mxu0 0.0
    %501 = vmatpush1.msra.mxu0 %v188
    %502 = vmatprep.subr.mxu0 0.0
    %503 = vmatpush1.msra.mxu0 %v187
    %504 = vmatprep.subr.mxu0 0.0
    %505 = vmatpush1.msra.mxu0 %v186
    %506 = vmatprep.subr.mxu0 0.0
    %507 = vmatpush1.msra.mxu0 %v185
    %508 = vmatprep.subr.mxu0 0.0
    %509 = vmatpush1.msra.mxu0 %v184
    %510 = vmatprep.subr.mxu0 0.0
    %511 = vmatpush1.msra.mxu0 %v183
    %512 = vmatprep.subr.mxu0 0.0
    %513 = vmatpush1.msra.mxu0 %v182
    %514 = vmatprep.subr.mxu0 0.0
    %515 = vmatpush1.msra.mxu0 %v181
    %516 = vmatprep.subr.mxu0 0.0
    %517 = vmatpush1.msra.mxu0 %v180
    %518 = vmatprep.subr.mxu0 0.0
    %519 = vmatpush1.msra.mxu0 %v179
    %520 = vmatprep.subr.mxu0 0.0
    %521 = vmatpush1.msra.mxu0 %v178
    %522 = vmatprep.subr.mxu0 0.0
    %523 = vmatpush1.msra.mxu0 %v177
    %524 = vmatprep.subr.mxu0 0.0
    %525 = vmatpush1.msra.mxu0 %v176
    %526 = vmatprep.subr.mxu0 0.0
    %527 = vmatpush2.msra.mxu0 %v207
    %528 = vmatprep.subr.mxu0 0.0
    %529 = vmatpush2.msra.mxu0 %v206
    %530 = vmatprep.subr.mxu0 0.0
    %531 = vmatpush2.msra.mxu0 %v205
    %532 = vmatprep.subr.mxu0 0.0
    %533 = vmatpush2.msra.mxu0 %v204
    %534 = vmatprep.subr.mxu0 0.0
    %535 = vmatpush2.msra.mxu0 %v203
    %536 = vmatprep.subr.mxu0 0.0
    %537 = vmatpush2.msra.mxu0 %v202
    %538 = vmatprep.subr.mxu0 0.0
    %539 = vmatpush2.msra.mxu0 %v201
    %540 = vmatprep.subr.mxu0 0.0
    %541 = vmatpush2.msra.mxu0 %v200
    %542 = vmatprep.subr.mxu0 0.0
    %543 = vmatpush2.msra.mxu0 %v199
    %544 = vmatprep.subr.mxu0 0.0
    %545 = vmatpush2.msra.mxu0 %v198
    %546 = vmatprep.subr.mxu0 0.0
    %547 = vmatpush2.msra.mxu0 %v197
    %548 = vmatprep.subr.mxu0 0.0
    %549 = vmatpush2.msra.mxu0 %v196
    %550 = vmatprep.subr.mxu0 0.0
    %551 = vmatpush2.msra.mxu0 %v195
    %552 = vmatprep.subr.mxu0 0.0
    %553 = vmatpush2.msra.mxu0 %v194
    %554 = vmatprep.subr.mxu0 0.0
    %555 = vmatpush2.msra.mxu0 %v193
    %556 = vmatprep.subr.mxu0 0.0
    %557 = vmatpush2.msra.mxu0 %v192
    %558 = vmatprep.mubr.f32.mxu0 %v79
    %559 = vmatmul.mubr.f32.gmra.mxu0 %v78
    %v560 = vpop.f32.mrf.mxu0
    %v561 = vadd.f32 %v491, %v560
    %v562 = vpop.f32.mrf.mxu0
    %563 = vdwg.mxu0
    %v564 = vld [vmem:[%s2] sm:$0xff]
    %v565 = vld [vmem:[%s5] sm:$0x1]
    %567 = vset.pattern.permute.xlu0 0
    %568 = vperm.xlu0 %567, %v564
    %v569 = vpop.permute.xlu0 %568
    %v572 = vlaneseq
    %v573 = vshrl.u32 %v572, 7
    %v574 = vsub.s32 0, %v573
    %v575 = vrot.slane %v565, %v574
    %v577 = vmul.f32 %v569, %v575
    %v578 = vadd.f32 %v561, %v577
    %v579 = vld [vmem:[%s6] sm:$0x1]
    %v581 = vlaneseq
    %v582 = vshrl.u32 %v581, 7
    %v583 = vsub.s32 0, %v582
    %v584 = vrot.slane %v579, %v583
    %v586 = vadd.f32 %v578, %v584
    %v587 = vmax.f32 %v586, 0.0
    %v588 = vld [vmem:[#allocation7] sm:$0xff]
    %v589 = vld [vmem:[#allocation7 + $0x8] sm:$0xff]
    %v590 = vld [vmem:[#allocation7 + $0x10] sm:$0xff]
    %v591 = vld [vmem:[#allocation7 + $0x18] sm:$0xff]
    %v592 = vld [vmem:[#allocation7 + $0x20] sm:$0xff]
    %v593 = vld [vmem:[#allocation7 + $0x28] sm:$0xff]
    %v594 = vld [vmem:[#allocation7 + $0x30] sm:$0xff]
    %v595 = vld [vmem:[#allocation7 + $0x38] sm:$0xff]
    %v596 = vld [vmem:[#allocation7 + $0x40] sm:$0xff]
    %v597 = vld [vmem:[#allocation7 + $0x48] sm:$0xff]
    %v598 = vld [vmem:[#allocation7 + $0x50] sm:$0xff]
    %v599 = vld [vmem:[#allocation7 + $0x58] sm:$0xff]
    %v600 = vld [vmem:[#allocation7 + $0x60] sm:$0xff]
    %v601 = vld [vmem:[#allocation7 + $0x68] sm:$0xff]
    %v602 = vld [vmem:[#allocation7 + $0x70] sm:$0xff]
    %v603 = vld [vmem:[#allocation7 + $0x78] sm:$0xff]
    %v604 = vld [vmem:[%s8] sm:$0x1]
    %v606 = vlaneseq
    %v607 = vshrl.u32 %v606, 7
    %v608 = vsub.s32 0, %v607
    %v609 = vrot.slane %v604, %v608
    %611 = vmatprep.subr.mxu0 0.0
    %612 = vmatpush1.msra.mxu0 %v603
    %613 = vmatprep.subr.mxu0 0.0
    %614 = vmatpush1.msra.mxu0 %v602
    %615 = vmatprep.subr.mxu0 0.0
    %616 = vmatpush1.msra.mxu0 %v601
    %617 = vmatprep.subr.mxu0 0.0
    %618 = vmatpush1.msra.mxu0 %v600
    %619 = vmatprep.subr.mxu0 0.0
    %620 = vmatpush1.msra.mxu0 %v599
    %621 = vmatprep.subr.mxu0 0.0
    %622 = vmatpush1.msra.mxu0 %v598
    %623 = vmatprep.subr.mxu0 0.0
    %624 = vmatpush1.msra.mxu0 %v597
    %625 = vmatprep.subr.mxu0 0.0
    %626 = vmatpush1.msra.mxu0 %v596
    %627 = vmatprep.subr.mxu0 0.0
    %628 = vmatpush1.msra.mxu0 %v595
    %629 = vmatprep.subr.mxu0 0.0
    %630 = vmatpush1.msra.mxu0 %v594
    %631 = vmatprep.subr.mxu0 0.0
    %632 = vmatpush1.msra.mxu0 %v593
    %633 = vmatprep.subr.mxu0 0.0
    %634 = vmatpush1.msra.mxu0 %v592
    %635 = vmatprep.subr.mxu0 0.0
    %636 = vmatpush1.msra.mxu0 %v591
    %637 = vmatprep.subr.mxu0 0.0
    %638 = vmatpush1.msra.mxu0 %v590
    %639 = vmatprep.subr.mxu0 0.0
    %640 = vmatpush1.msra.mxu0 %v589
    %641 = vmatprep.subr.mxu0 0.0
    %642 = vmatpush1.msra.mxu0 %v588
    %643 = vmatprep.subr.mxu0 0.0
    %644 = vmatpush2.msra.mxu0 0.0
    %645 = vmatprep.subr.mxu0 0.0
    %646 = vmatpush2.msra.mxu0 0.0
    %647 = vmatprep.subr.mxu0 0.0
    %648 = vmatpush2.msra.mxu0 0.0
    %649 = vmatprep.subr.mxu0 0.0
    %650 = vmatpush2.msra.mxu0 0.0
    %651 = vmatprep.subr.mxu0 0.0
    %652 = vmatpush2.msra.mxu0 0.0
    %653 = vmatprep.subr.mxu0 0.0
    %654 = vmatpush2.msra.mxu0 0.0
    %655 = vmatprep.subr.mxu0 0.0
    %656 = vmatpush2.msra.mxu0 0.0
    %657 = vmatprep.subr.mxu0 0.0
    %658 = vmatpush2.msra.mxu0 0.0
    %659 = vmatprep.subr.mxu0 0.0
    %660 = vmatpush2.msra.mxu0 0.0
    %661 = vmatprep.subr.mxu0 0.0
    %662 = vmatpush2.msra.mxu0 0.0
    %663 = vmatprep.subr.mxu0 0.0
    %664 = vmatpush2.msra.mxu0 0.0
    %665 = vmatprep.subr.mxu0 0.0
    %666 = vmatpush2.msra.mxu0 0.0
    %667 = vmatprep.subr.mxu0 0.0
    %668 = vmatpush2.msra.mxu0 0.0
    %669 = vmatprep.subr.mxu0 0.0
    %670 = vmatpush2.msra.mxu0 0.0
    %671 = vmatprep.subr.mxu0 0.0
    %672 = vmatpush2.msra.mxu0 0.0
    %673 = vmatprep.subr.mxu0 0.0
    %674 = vmatpush2.msra.mxu0 0.0
    %675 = vmatprep.mubr.f32.mxu0 0.0
    %676 = vmatmul.mubr.f32.gmra.mxu0 %v587
    %v677 = vpop.f32.mrf.mxu0
    %v678 = vadd.f32 %v609, %v677
    %v679 = vpop.f32.mrf.mxu0
    %680 = vdwg.mxu0
    %v681 = vmax.f32 %v678, 0.0
    %682 = vst [vmem:[#allocation8] sm:$0xff] %v681
    // Predicated region
    $region50: #{tpu_custom_call.1} parent=1 // pred_check
      _
    $region51: #{tpu_custom_call.1} parent=1 // pred_check_branch
      %684 = sbr.rel (0) target = $region53
    $region52: #{tpu_custom_call.1} parent=1 // pred_region
      %s686 = ssub.s32 128, 128
      %687 = vsyncadd [#allocation4], %s686
      %s689 = sshll.u32 [#allocation8], 4
      %s690 = int_to_ptr.vmem [resolvable:$true] %s689
      %692 = dma.vmem_to_hbm [thread:$0]  %s690, 128, %s9, [#allocation4]
    $region53: #{tpu_custom_call.1} parent=1 // pred_fallthru
      _
    // Predicated region
    $region54: #{tpu_custom_call.1} parent=1 // pred_check
      _
    $region55: #{tpu_custom_call.1} parent=1 // pred_check_branch
      %694 = sbr.rel (0) target = $region57
    $region56: #{tpu_custom_call.1} parent=1 // pred_region
      %695 = dma.done [#allocation4], 128
    $region57: #{tpu_custom_call.1} parent=1 // pred_fallthru
      _
    %696 = vsyncpa [#allocation3], 1
    %697 = vsyncpa [#allocation6], 1
    %698 = vsyncpa [#allocation4], 1

</llo_original>
